<compile_context>
chip_gen: v7x
topology: tpu7x:2x2x1
jax: 0.10.0
libtpu: 0.0.40
codegen_flags: <defaults>
</compile_context>

<pallas_src>
import functools

import jax
import jax.numpy as jnp
from jax.experimental import pallas as pl
from jax.experimental.pallas import tpu as pltpu


def _contrastive_loss_kernel(o1_ref, o2_ref, lbl_ref, part_ref, acc_ref, *,
                             margin, n_rows, block_rows, mask_from):
    c = pl.program_id(0)            # core axis ("parallel")
    i = pl.program_id(1)            # per-core reduction step ("arbitrary")
    steps = pl.num_programs(1)
    blk = c * steps + i             # global (unclamped) block index

    @pl.when(i == 0)
    def _init():
        acc_ref[...] = jnp.zeros_like(acc_ref)

    # All math in f32 on the VPU (no MXU needed for this module).
    o1 = o1_ref[...].astype(jnp.float32)
    o2 = o2_ref[...].astype(jnp.float32)
    diff = o1 - o2
    dist_sq = jnp.sum(diff * diff, axis=1, keepdims=True)          # (TB, 1)

    lbl = lbl_ref[...].astype(jnp.float32)                         # (TB, 1)
    hinge = jnp.maximum(margin - dist_sq, 0.0)
    # Exact algebraic form of (1-l)*d + l*hinge (also correct for soft labels).
    per_row = dist_sq + lbl * (hinge - dist_sq)                    # (TB, 1)

    if mask_from is None:
        # No partial / duplicated-clamped blocks possible: plain vector accumulate.
        acc_ref[...] += per_row
    else:
        @pl.when(blk < mask_from)
        def _full_tile():
            acc_ref[...] += per_row

        @pl.when(blk >= mask_from)
        def _edge_tile():
            # Mask rows past the true batch (partial last tile, or blocks whose
            # index was clamped in the index_map and would otherwise double count).
            row = blk * block_rows + jax.lax.broadcasted_iota(
                jnp.int32, per_row.shape, 0)
            acc_ref[...] += jnp.where(row < n_rows, per_row, 0.0)

    @pl.when(i == steps - 1)
    def _finalize():
        # Single cross-sublane reduce per core; per-core partial (unnormalized) sum.
        part_ref[...] = jnp.sum(acc_ref[...], axis=0, keepdims=True)


def _choose_block_rows(batch, dim, itemsize, *,
                       target_block_bytes=2 << 20, max_rows=4096):
    """Pick a row tile targeting ~2 MiB per input block, TB a multiple of 8."""
    tb = target_block_bytes // max(dim * itemsize, 1)
    tb = max(8, min(tb, max_rows))
    tb = (tb // 8) * 8
    if batch <= tb:
        return batch          # full array dim -> always a legal block shape
    return tb


def contrastive_loss(output1, output2, label, margin, *,
                     block_rows=None, num_cores=2):
    """output1/output2: (B, D) (f32 or bf16); label: (B,) or (B, 1); returns scalar f32."""
    B, D = output1.shape
    label2d = jnp.reshape(label, (B, 1))

    itemsize = jnp.dtype(output1.dtype).itemsize
    if block_rows is None:
        TB = _choose_block_rows(B, D, itemsize)
    else:
        TB = min(int(block_rows), B)
        if TB < B:
            TB = max(8, (TB // 8) * 8)

    num_blocks = pl.cdiv(B, TB)
    NC = max(1, min(num_cores, num_blocks))       # cores actually used
    S = pl.cdiv(num_blocks, NC)                   # reduction steps per core

    # Trace-time decision: does any grid step need row masking?
    if B % TB != 0:
        mask_from = num_blocks - 1                # partial last real block (+ clamped dups)
    elif NC * S != num_blocks:
        mask_from = num_blocks                    # only clamped duplicate blocks
    else:
        mask_from = None                          # no masking emitted at all

    if NC * S == num_blocks:
        in_idx = lambda c, i: (c * S + i, 0)
    else:
        # Clamp so the last core's padding steps re-read the last real block
        # (their contribution is masked to exactly zero in the kernel).
        in_idx = lambda c, i: (jnp.minimum(c * S + i, num_blocks - 1), 0)

    kernel = functools.partial(
        _contrastive_loss_kernel,
        margin=float(margin), n_rows=B, block_rows=TB, mask_from=mask_from,
    )

    # VMEM budget: 2 embedding inputs x 2 pipeline buffers x block, plus label
    # buffers, the (TB,1) accumulator and headroom. Stays well under v5e's 16 MiB
    # scoped default and v7x's 64 MiB physical VMEM for the derived tile sizes.
    in_block_bytes = TB * D * itemsize
    vmem_limit = int(min(max(4 * in_block_bytes + (8 << 20), 16 << 20), 48 << 20))

    partials = pl.pallas_call(
        kernel,
        out_shape=jax.ShapeDtypeStruct((NC, 1), jnp.float32),
        grid_spec=pltpu.PrefetchScalarGridSpec(
            num_scalar_prefetch=0,
            grid=(NC, S),
            in_specs=[
                pl.BlockSpec((TB, D), in_idx),    # output1 row tile
                pl.BlockSpec((TB, D), in_idx),    # output2 row tile
                pl.BlockSpec((TB, 1), in_idx),    # label row tile
            ],
            # One resident (1,1) partial-sum block per core across the inner axis.
            out_specs=pl.BlockSpec((1, 1), lambda c, i: (c, 0)),
            scratch_shapes=[pltpu.VMEM((TB, 1), jnp.float32)],
        ),
        compiler_params=pltpu.CompilerParams(
            # Core axis shards across TensorCores (v7x); inner axis is the reduction.
            dimension_semantics=("parallel", "arbitrary"),
            vmem_limit_bytes=vmem_limit,
        ),
    )(output1, output2, label2d)

    return jnp.sum(partials) / B


if __name__ == "__main__":
    # Small deterministic example consistent with the module's forward:
    # two embedding batches (B, D) and a binary label per pair.
    B, D = 200, 128
    margin = 1.0

    key = jax.random.PRNGKey(0)
    k1, k2, k3 = jax.random.split(key, 3)
    output1 = 0.05 * jax.random.normal(k1, (B, D), jnp.float32)
    output2 = 0.05 * jax.random.normal(k2, (B, D), jnp.float32)
    label = jax.random.bernoulli(k3, 0.5, (B,)).astype(jnp.float32)

    # Pure-JAX reference of the exact PyTorch semantics.
    d = jnp.sum((output1 - output2) ** 2, axis=1)
    ref = jnp.mean((1.0 - label) * d + label * jnp.maximum(margin - d, 0.0))

    # 1) auto-derived tile: single full-batch block, no masking.
    loss_a = contrastive_loss(output1, output2, label, margin)
    # 2) forced small tiles: exercises the 2-core split + partial-tile masking.
    loss_b = contrastive_loss(output1, output2, label, margin, block_rows=64)
    # 3) odd block count: exercises clamped (duplicate) blocks on the second core.
    loss_c = contrastive_loss(output1, output2, label, margin, block_rows=72)
    jax.block_until_ready((loss_a, loss_b, loss_c))

    for loss in (loss_a, loss_b, loss_c):
        assert loss.shape == ()
        assert jnp.allclose(loss, ref, atol=1e-5, rtol=1e-5), (loss, ref)

    print("KERNEL_OK")
</pallas_src>

<mosaic_0001>
module attributes {stable_mosaic.version = 11 : i64} {
  func.func @_contrastive_loss_kernel(%arg0: i32, %arg1: i32, %arg2: memref<200x128xf32, #tpu.memory_space<vmem>>, %arg3: memref<200x128xf32, #tpu.memory_space<vmem>>, %arg4: memref<200x1xf32, #tpu.memory_space<vmem>>, %arg5: memref<1x1xf32, #tpu.memory_space<vmem>>, %arg6: memref<200x1xf32, #tpu.memory_space<vmem>>) attributes {dimension_semantics = [#tpu.dimension_semantics<parallel>, #tpu.dimension_semantics<arbitrary>], iteration_bounds = array<i64: 1, 1>, scalar_prefetch = 0 : i64, scratch_operands = 1 : i64, tpu.core_type = #tpu.core_type<tc>, window_params = [{transform_indices = @transform_0, window_bounds = array<i64: 200, 128>}, {transform_indices = @transform_1, window_bounds = array<i64: 200, 128>}, {transform_indices = @transform_2, window_bounds = array<i64: 200, 1>}, {transform_indices = @transform_3, window_bounds = array<i64: 1, 1>}]} {
    %c0_i32 = arith.constant 0 : i32
    %0 = arith.cmpi eq, %arg1, %c0_i32 : i32
    %1 = arith.extui %0 : i1 to i32
    %c0_i32_0 = arith.constant 0 : i32
    %2 = arith.cmpi ne, %1, %c0_i32_0 : i32
    scf.if %2 {
      %cst_14 = arith.constant 0.000000e+00 : f32
      %23 = vector.broadcast %cst_14 : f32 to vector<200x1xf32>
      %c0_15 = arith.constant 0 : index
      %c0_16 = arith.constant 0 : index
      %24 = vector.load %arg6[%c0_15, %c0_16] : memref<200x1xf32, #tpu.memory_space<vmem>>, vector<200x1xf32>
      tpu.vector_store %arg6[%c0_15, %c0_16], %23 {strides = array<i32>} : memref<200x1xf32, #tpu.memory_space<vmem>>, vector<200x1xf32>,
    } else {
    }
    %c0 = arith.constant 0 : index
    %c0_1 = arith.constant 0 : index
    %3 = vector.load %arg2[%c0, %c0_1] : memref<200x128xf32, #tpu.memory_space<vmem>>, vector<200x128xf32>
    %c0_2 = arith.constant 0 : index
    %c0_3 = arith.constant 0 : index
    %4 = vector.load %arg3[%c0_2, %c0_3] : memref<200x128xf32, #tpu.memory_space<vmem>>, vector<200x128xf32>
    %5 = arith.subf %3, %4 : vector<200x128xf32>
    %6 = arith.mulf %5, %5 : vector<200x128xf32>
    %cst = arith.constant dense<0.000000e+00> : vector<200xf32>
    %7 = vector.multi_reduction <add>, %6, %cst [1] : vector<200x128xf32> to vector<200xf32>
    %8 = vector.shape_cast %7 : vector<200xf32> to vector<200x1xf32>
    %c0_4 = arith.constant 0 : index
    %c0_5 = arith.constant 0 : index
    %9 = vector.load %arg4[%c0_4, %c0_5] : memref<200x1xf32, #tpu.memory_space<vmem>>, vector<200x1xf32>
    %cst_6 = arith.constant 1.000000e+00 : f32
    %10 = vector.broadcast %cst_6 : f32 to vector<200x1xf32>
    %11 = arith.subf %10, %8 : vector<200x1xf32>
    %cst_7 = arith.constant 0.000000e+00 : f32
    %12 = vector.broadcast %cst_7 : f32 to vector<200x1xf32>
    %13 = arith.maximumf %11, %12 : vector<200x1xf32>
    %14 = arith.subf %13, %8 : vector<200x1xf32>
    %15 = arith.mulf %9, %14 : vector<200x1xf32>
    %16 = arith.addf %8, %15 : vector<200x1xf32>
    %c0_8 = arith.constant 0 : index
    %c0_9 = arith.constant 0 : index
    %17 = vector.load %arg6[%c0_8, %c0_9] : memref<200x1xf32, #tpu.memory_space<vmem>>, vector<200x1xf32>
    %18 = arith.addf %17, %16 : vector<200x1xf32>
    %c0_10 = arith.constant 0 : index
    %c0_11 = arith.constant 0 : index
    %19 = vector.load %arg6[%c0_10, %c0_11] : memref<200x1xf32, #tpu.memory_space<vmem>>, vector<200x1xf32>
    tpu.vector_store %arg6[%c0_10, %c0_11], %18 {strides = array<i32>} : memref<200x1xf32, #tpu.memory_space<vmem>>, vector<200x1xf32>,
    %c0_i32_12 = arith.constant 0 : i32
    %20 = arith.cmpi eq, %arg1, %c0_i32_12 : i32
    %21 = arith.extui %20 : i1 to i32
    %c0_i32_13 = arith.constant 0 : i32
    %22 = arith.cmpi ne, %21, %c0_i32_13 : i32
    scf.if %22 {
      %c0_14 = arith.constant 0 : index
      %c0_15 = arith.constant 0 : index
      %23 = vector.load %arg6[%c0_14, %c0_15] : memref<200x1xf32, #tpu.memory_space<vmem>>, vector<200x1xf32>
      %cst_16 = arith.constant dense<0.000000e+00> : vector<1xf32>
      %24 = vector.multi_reduction <add>, %23, %cst_16 [0] : vector<200x1xf32> to vector<1xf32>
      %25 = vector.shape_cast %24 : vector<1xf32> to vector<1x1xf32>
      %c0_17 = arith.constant 0 : index
      %c0_18 = arith.constant 0 : index
      %26 = vector.load %arg5[%c0_17, %c0_18] : memref<1x1xf32, #tpu.memory_space<vmem>>, vector<1x1xf32>
      tpu.vector_store %arg5[%c0_17, %c0_18], %25 {strides = array<i32>} : memref<1x1xf32, #tpu.memory_space<vmem>>, vector<1x1xf32>,
    } else {
    }
    return
  }
  func.func @transform_0(%arg0: i32, %arg1: i32) -> (i32, i32) {
    %c1_i32 = arith.constant 1 : i32
    %0 = arith.muli %arg0, %c1_i32 : i32
    %1 = arith.addi %0, %arg1 : i32
    %c0_i32 = arith.constant 0 : i32
    %c0_i32_0 = arith.constant 0 : i32
    return %1, %c0_i32 : i32, i32
  }
  func.func @transform_1(%arg0: i32, %arg1: i32) -> (i32, i32) {
    %c1_i32 = arith.constant 1 : i32
    %0 = arith.muli %arg0, %c1_i32 : i32
    %1 = arith.addi %0, %arg1 : i32
    %c0_i32 = arith.constant 0 : i32
    %c0_i32_0 = arith.constant 0 : i32
    return %1, %c0_i32 : i32, i32
  }
  func.func @transform_2(%arg0: i32, %arg1: i32) -> (i32, i32) {
    %c1_i32 = arith.constant 1 : i32
    %0 = arith.muli %arg0, %c1_i32 : i32
    %1 = arith.addi %0, %arg1 : i32
    %c0_i32 = arith.constant 0 : i32
    %c0_i32_0 = arith.constant 0 : i32
    return %1, %c0_i32 : i32, i32
  }
  func.func @transform_3(%arg0: i32, %arg1: i32) -> (i32, i32) {
    %c0_i32 = arith.constant 0 : i32
    %c0_i32_0 = arith.constant 0 : i32
    return %arg0, %c0_i32 : i32, i32
  }
}

</mosaic_0001>

<llo_original>
// kernel: tpu_custom_call.1
$region0: #{tpu_custom_call.1}
  #allocation0 [shape = 'u32[]', space=smem, size = 0x4, offset = 0x4, fixed_abs, tag = 'smem constant byte address 0x4 - core index']
  #allocation1 [shape = 'u32[144,128]{1,0:T(1,128)}', space=vmem, size = 0x12000, scoped, tag = 'internal scratch']
  #allocation2 [shape = 'f32[200,1]{1,0:T(8,128)}', space=vmem, size = 0x19000, scoped, tag = 'scratch operand']
  %s0 = inlined_call_operand.vmem [shape: f32[200,128], index: 0, kind: input, shape index: {}]
  %s1 = inlined_call_operand.hbm [shape: f32[200,128], index: 1, kind: input, shape index: {}]
  %s2 = inlined_call_operand.vmem [shape: f32[200,1], index: 2, kind: input, shape index: {}]
  %s3 = inlined_call_operand.hbm [shape: f32[1,1], index: 3, kind: output, shape index: {}]
  %s4 = sld [smem:[#allocation0]]
  $region34: #{tpu_custom_call.1} parent=0
    _
  %s6 = ssub.s32 1, %s4
  %s7 = scalar_select 0, %s6, %s4
  $region1: #{tpu_custom_call.1} parent=0
    #allocation3 [shape = 'u8[102400]{0}', space=vmem, size = 0x19000, scoped, tag = 'input window, operand 1, single buffered']
    #allocation4 [shape = 's32[1]{0}', space=sflag, size = 0x4, scoped, tag = 'scoped memory for tpu_custom_call.1']
    #allocation5 [shape = 's32[1]{0}', space=sflag, size = 0x4, scoped, tag = 'scoped memory for tpu_custom_call.1']
    #allocation6 [shape = 'u8[512]{0}', space=vmem, size = 0x400, scoped, tag = 'output window, operand 0, single buffered']
    %8 = vsyncpa [#allocation4], 0
    %9 = vsyncpa [#allocation5], 0
    // Predicated region
    $region2: #{tpu_custom_call.1} parent=1 // pred_check
      _
    $region3: #{tpu_custom_call.1} parent=1 // pred_check_branch
      %11 = sbr.rel (0) target = $region5
    $region4: #{tpu_custom_call.1} parent=1 // pred_region
      %s12 = sadd.s32 0, 0
      %s13 = smul.u32 25, %s12
      %p14 = scmp.lt.s32.totalorder %s13, 24
      %s15 = scalar_select %p14, %s13, 24
      %s16 = smul.addr %s15, 8
      %s17 = scalar_lea.vmem %s0, %s16
      %s18 = sadd.s32 0, 0
      %s19 = smul.u32 25, %s18
    $region5: #{tpu_custom_call.1} parent=1 // pred_fallthru
      _
    // Predicated region
    $region6: #{tpu_custom_call.1} parent=1 // pred_check
      _
    $region7: #{tpu_custom_call.1} parent=1 // pred_check_branch
      %21 = sbr.rel (0) target = $region9
    $region8: #{tpu_custom_call.1} parent=1 // pred_region
      %s22 = sadd.s32 0, 0
      %s23 = smul.u32 25, %s22
      %s25 = ssub.s32 3200, 3200
      %26 = vsyncadd [#allocation4], %s25
      %s27 = smul.addr %s23, 128
      %s28 = scalar_lea.hbm %s1, %s27
      %s29 = sshll.u32 [#allocation3], 4
      %s30 = int_to_ptr.vmem [resolvable:$true] %s29
      %35 = dma.hbm_to_vmem [thread:$0]  %s28, 3200, %s30, [#allocation4], 128, 128, 8
    $region9: #{tpu_custom_call.1} parent=1 // pred_fallthru
      _
    // Predicated region
    $region10: #{tpu_custom_call.1} parent=1 // pred_check
      _
    $region11: #{tpu_custom_call.1} parent=1 // pred_check_branch
      %37 = sbr.rel (0) target = $region13
    $region12: #{tpu_custom_call.1} parent=1 // pred_region
      %s38 = sadd.s32 0, 0
      %s39 = smul.u32 25, %s38
      %p40 = scmp.lt.s32.totalorder %s39, 24
      %s41 = scalar_select %p40, %s39, 24
      %s42 = smul.addr %s41, 8
      %s43 = scalar_lea.vmem %s2, %s42
      %s44 = sadd.s32 0, 0
      %s45 = smul.u32 25, %s44
    $region13: #{tpu_custom_call.1} parent=1 // pred_fallthru
      _
    // Predicated region
    $region14: #{tpu_custom_call.1} parent=1 // pred_check
      _
    $region15: #{tpu_custom_call.1} parent=1 // pred_check_branch
      %47 = sbr.rel (0) target = $region17
    $region16: #{tpu_custom_call.1} parent=1 // pred_region
      %48 = dma.done [#allocation4], 3200
    $region17: #{tpu_custom_call.1} parent=1 // pred_fallthru
      _
    %s49 = sadd.s32 0, 0
    %s50 = smul.u32 25, %s49
    %p51 = scmp.lt.s32.totalorder %s50, 24
    %s52 = scalar_select %p51, %s50, 24
    %s53 = smul.addr %s52, 8
    %s54 = scalar_lea.vmem %s0, %s53
    %s55 = sadd.s32 0, 0
    %s56 = smul.u32 25, %s55
    %p57 = scmp.lt.s32.totalorder %s56, 24
    %s58 = scalar_select %p57, %s56, 24
    %s59 = smul.addr %s58, 8
    %s60 = scalar_lea.vmem %s2, %s59
    %s61 = sadd.s32 0, 0
    %s62 = smul.u32 25, %s61
    %p63 = scmp.lt.s32.totalorder %s62, 24
    %s64 = scalar_select %p63, %s62, 24
    %s65 = smul.addr %s64, 8
    %s66 = scalar_lea.vmem %s0, %s65
    %s67 = sadd.s32 0, 0
    %s68 = smul.u32 25, %s67
    %s69 = sadd.s32 0, 0
    %s70 = smul.u32 25, %s69
    %s71 = sadd.s32 0, 0
    %s72 = smul.u32 25, %s71
    %p73 = scmp.lt.s32.totalorder %s72, 24
    %s74 = scalar_select %p73, %s72, 24
    %s75 = smul.addr %s74, 8
    %s76 = scalar_lea.vmem %s2, %s75
    %s77 = sadd.s32 0, 0
    %s78 = smul.u32 25, %s77
    %p79 = scmp.eq.s32.totalorder 0, 0
    // Predicated region
    $region18: #{tpu_custom_call.1} parent=1 // pred_check
      %p80 = pneg %p79
    $region19: #{tpu_custom_call.1} parent=1 // pred_check_branch
      %82 = sbr.rel (%p80) target = $region21
    $region20: #{tpu_custom_call.1} parent=1 // pred_region
      %vm83 = vcmask 7168
      %84 = vst.msk [vmem:[#allocation2] sm:$0xff] %vm83, 0.0
      %85 = vst.msk [vmem:[#allocation2 + $0x8] sm:$0xff] %vm83, 0.0
      %86 = vst.msk [vmem:[#allocation2 + $0x10] sm:$0xff] %vm83, 0.0
      %87 = vst.msk [vmem:[#allocation2 + $0x18] sm:$0xff] %vm83, 0.0
      %88 = vst.msk [vmem:[#allocation2 + $0x20] sm:$0xff] %vm83, 0.0
      %89 = vst.msk [vmem:[#allocation2 + $0x28] sm:$0xff] %vm83, 0.0
      %90 = vst.msk [vmem:[#allocation2 + $0x30] sm:$0xff] %vm83, 0.0
      %91 = vst.msk [vmem:[#allocation2 + $0x38] sm:$0xff] %vm83, 0.0
      %92 = vst.msk [vmem:[#allocation2 + $0x40] sm:$0xff] %vm83, 0.0
      %93 = vst.msk [vmem:[#allocation2 + $0x48] sm:$0xff] %vm83, 0.0
      %94 = vst.msk [vmem:[#allocation2 + $0x50] sm:$0xff] %vm83, 0.0
      %95 = vst.msk [vmem:[#allocation2 + $0x58] sm:$0xff] %vm83, 0.0
      %96 = vst.msk [vmem:[#allocation2 + $0x60] sm:$0xff] %vm83, 0.0
      %97 = vst.msk [vmem:[#allocation2 + $0x68] sm:$0xff] %vm83, 0.0
      %98 = vst.msk [vmem:[#allocation2 + $0x70] sm:$0xff] %vm83, 0.0
      %99 = vst.msk [vmem:[#allocation2 + $0x78] sm:$0xff] %vm83, 0.0
      %100 = vst.msk [vmem:[#allocation2 + $0x80] sm:$0xff] %vm83, 0.0
      %101 = vst.msk [vmem:[#allocation2 + $0x88] sm:$0xff] %vm83, 0.0
      %102 = vst.msk [vmem:[#allocation2 + $0x90] sm:$0xff] %vm83, 0.0
      %103 = vst.msk [vmem:[#allocation2 + $0x98] sm:$0xff] %vm83, 0.0
      %104 = vst.msk [vmem:[#allocation2 + $0xa0] sm:$0xff] %vm83, 0.0
      %105 = vst.msk [vmem:[#allocation2 + $0xa8] sm:$0xff] %vm83, 0.0
      %106 = vst.msk [vmem:[#allocation2 + $0xb0] sm:$0xff] %vm83, 0.0
      %107 = vst.msk [vmem:[#allocation2 + $0xb8] sm:$0xff] %vm83, 0.0
      %108 = vst.msk [vmem:[#allocation2 + $0xc0] sm:$0xff] %vm83, 0.0
    $region21: #{tpu_custom_call.1} parent=1 // pred_fallthru
      _
    %v109 = vld [vmem:[%s66] sm:$0xff]
    %v110 = vld [vmem:[%s66 + $0x8] sm:$0xff]
    %v111 = vld [vmem:[%s66 + $0x10] sm:$0xff]
    %v112 = vld [vmem:[%s66 + $0x18] sm:$0xff]
    %v113 = vld [vmem:[%s66 + $0x20] sm:$0xff]
    %v114 = vld [vmem:[%s66 + $0x28] sm:$0xff]
    %v115 = vld [vmem:[%s66 + $0x30] sm:$0xff]
    %v116 = vld [vmem:[%s66 + $0x38] sm:$0xff]
    %v117 = vld [vmem:[%s66 + $0x40] sm:$0xff]
    %v118 = vld [vmem:[%s66 + $0x48] sm:$0xff]
    %v119 = vld [vmem:[%s66 + $0x50] sm:$0xff]
    %v120 = vld [vmem:[%s66 + $0x58] sm:$0xff]
    %v121 = vld [vmem:[%s66 + $0x60] sm:$0xff]
    %v122 = vld [vmem:[%s66 + $0x68] sm:$0xff]
    %v123 = vld [vmem:[%s66 + $0x70] sm:$0xff]
    %v124 = vld [vmem:[%s66 + $0x78] sm:$0xff]
    %v125 = vld [vmem:[%s66 + $0x80] sm:$0xff]
    %v126 = vld [vmem:[%s66 + $0x88] sm:$0xff]
    %v127 = vld [vmem:[%s66 + $0x90] sm:$0xff]
    %v128 = vld [vmem:[%s66 + $0x98] sm:$0xff]
    %v129 = vld [vmem:[%s66 + $0xa0] sm:$0xff]
    %v130 = vld [vmem:[%s66 + $0xa8] sm:$0xff]
    %v131 = vld [vmem:[%s66 + $0xb0] sm:$0xff]
    %v132 = vld [vmem:[%s66 + $0xb8] sm:$0xff]
    %v133 = vld [vmem:[%s66 + $0xc0] sm:$0xff]
    %v134 = vld [vmem:[#allocation3] sm:$0xff]
    %v135 = vld [vmem:[#allocation3 + $0x8] sm:$0xff]
    %v136 = vld [vmem:[#allocation3 + $0x10] sm:$0xff]
    %v137 = vld [vmem:[#allocation3 + $0x18] sm:$0xff]
    %v138 = vld [vmem:[#allocation3 + $0x20] sm:$0xff]
    %v139 = vld [vmem:[#allocation3 + $0x28] sm:$0xff]
    %v140 = vld [vmem:[#allocation3 + $0x30] sm:$0xff]
    %v141 = vld [vmem:[#allocation3 + $0x38] sm:$0xff]
    %v142 = vld [vmem:[#allocation3 + $0x40] sm:$0xff]
    %v143 = vld [vmem:[#allocation3 + $0x48] sm:$0xff]
    %v144 = vld [vmem:[#allocation3 + $0x50] sm:$0xff]
    %v145 = vld [vmem:[#allocation3 + $0x58] sm:$0xff]
    %v146 = vld [vmem:[#allocation3 + $0x60] sm:$0xff]
    %v147 = vld [vmem:[#allocation3 + $0x68] sm:$0xff]
    %v148 = vld [vmem:[#allocation3 + $0x70] sm:$0xff]
    %v149 = vld [vmem:[#allocation3 + $0x78] sm:$0xff]
    %v150 = vld [vmem:[#allocation3 + $0x80] sm:$0xff]
    %v151 = vld [vmem:[#allocation3 + $0x88] sm:$0xff]
    %v152 = vld [vmem:[#allocation3 + $0x90] sm:$0xff]
    %v153 = vld [vmem:[#allocation3 + $0x98] sm:$0xff]
    %v154 = vld [vmem:[#allocation3 + $0xa0] sm:$0xff]
    %v155 = vld [vmem:[#allocation3 + $0xa8] sm:$0xff]
    %v156 = vld [vmem:[#allocation3 + $0xb0] sm:$0xff]
    %v157 = vld [vmem:[#allocation3 + $0xb8] sm:$0xff]
    %v158 = vld [vmem:[#allocation3 + $0xc0] sm:$0xff]
    %v159 = vsub.f32 %v109, %v134
    %v160 = vsub.f32 %v110, %v135
    %v161 = vsub.f32 %v111, %v136
    %v162 = vsub.f32 %v112, %v137
    %v163 = vsub.f32 %v113, %v138
    %v164 = vsub.f32 %v114, %v139
    %v165 = vsub.f32 %v115, %v140
    %v166 = vsub.f32 %v116, %v141
    %v167 = vsub.f32 %v117, %v142
    %v168 = vsub.f32 %v118, %v143
    %v169 = vsub.f32 %v119, %v144
    %v170 = vsub.f32 %v120, %v145
    %v171 = vsub.f32 %v121, %v146
    %v172 = vsub.f32 %v122, %v147
    %v173 = vsub.f32 %v123, %v148
    %v174 = vsub.f32 %v124, %v149
    %v175 = vsub.f32 %v125, %v150
    %v176 = vsub.f32 %v126, %v151
    %v177 = vsub.f32 %v127, %v152
    %v178 = vsub.f32 %v128, %v153
    %v179 = vsub.f32 %v129, %v154
    %v180 = vsub.f32 %v130, %v155
    %v181 = vsub.f32 %v131, %v156
    %v182 = vsub.f32 %v132, %v157
    %v183 = vsub.f32 %v133, %v158
    %v184 = vmul.f32 %v159, %v159
    %v185 = vmul.f32 %v160, %v160
    %v186 = vmul.f32 %v161, %v161
    %v187 = vmul.f32 %v162, %v162
    %v188 = vmul.f32 %v163, %v163
    %v189 = vmul.f32 %v164, %v164
    %v190 = vmul.f32 %v165, %v165
    %v191 = vmul.f32 %v166, %v166
    %v192 = vmul.f32 %v167, %v167
    %v193 = vmul.f32 %v168, %v168
    %v194 = vmul.f32 %v169, %v169
    %v195 = vmul.f32 %v170, %v170
    %v196 = vmul.f32 %v171, %v171
    %v197 = vmul.f32 %v172, %v172
    %v198 = vmul.f32 %v173, %v173
    %v199 = vmul.f32 %v174, %v174
    %v200 = vmul.f32 %v175, %v175
    %v201 = vmul.f32 %v176, %v176
    %v202 = vmul.f32 %v177, %v177
    %v203 = vmul.f32 %v178, %v178
    %v204 = vmul.f32 %v179, %v179
    %v205 = vmul.f32 %v180, %v180
    %v206 = vmul.f32 %v181, %v181
    %v207 = vmul.f32 %v182, %v182
    %v208 = vmul.f32 %v183, %v183
    %209 = vadd.xlane.f32.xlu0 %v184
    %v210 = vpop.xlane.xlu0 %209
    %211 = vadd.xlane.f32.xlu0 %v185
    %v212 = vpop.xlane.xlu0 %211
    %213 = vadd.xlane.f32.xlu0 %v186
    %v214 = vpop.xlane.xlu0 %213
    %215 = vadd.xlane.f32.xlu0 %v187
    %v216 = vpop.xlane.xlu0 %215
    %217 = vadd.xlane.f32.xlu0 %v188
    %v218 = vpop.xlane.xlu0 %217
    %219 = vadd.xlane.f32.xlu0 %v189
    %v220 = vpop.xlane.xlu0 %219
    %221 = vadd.xlane.f32.xlu0 %v190
    %v222 = vpop.xlane.xlu0 %221
    %223 = vadd.xlane.f32.xlu0 %v191
    %v224 = vpop.xlane.xlu0 %223
    %225 = vadd.xlane.f32.xlu0 %v192
    %v226 = vpop.xlane.xlu0 %225
    %227 = vadd.xlane.f32.xlu0 %v193
    %v228 = vpop.xlane.xlu0 %227
    %229 = vadd.xlane.f32.xlu0 %v194
    %v230 = vpop.xlane.xlu0 %229
    %231 = vadd.xlane.f32.xlu0 %v195
    %v232 = vpop.xlane.xlu0 %231
    %233 = vadd.xlane.f32.xlu0 %v196
    %v234 = vpop.xlane.xlu0 %233
    %235 = vadd.xlane.f32.xlu0 %v197
    %v236 = vpop.xlane.xlu0 %235
    %237 = vadd.xlane.f32.xlu0 %v198
    %v238 = vpop.xlane.xlu0 %237
    %239 = vadd.xlane.f32.xlu0 %v199
    %v240 = vpop.xlane.xlu0 %239
    %241 = vadd.xlane.f32.xlu0 %v200
    %v242 = vpop.xlane.xlu0 %241
    %243 = vadd.xlane.f32.xlu0 %v201
    %v244 = vpop.xlane.xlu0 %243
    %245 = vadd.xlane.f32.xlu0 %v202
    %v246 = vpop.xlane.xlu0 %245
    %247 = vadd.xlane.f32.xlu0 %v203
    %v248 = vpop.xlane.xlu0 %247
    %249 = vadd.xlane.f32.xlu0 %v204
    %v250 = vpop.xlane.xlu0 %249
    %251 = vadd.xlane.f32.xlu0 %v205
    %v252 = vpop.xlane.xlu0 %251
    %253 = vadd.xlane.f32.xlu0 %v206
    %v254 = vpop.xlane.xlu0 %253
    %255 = vadd.xlane.f32.xlu0 %v207
    %v256 = vpop.xlane.xlu0 %255
    %257 = vadd.xlane.f32.xlu0 %v208
    %v258 = vpop.xlane.xlu0 %257
    %v259 = vld [vmem:[%s76] sm:$0xff]
    %v260 = vld [vmem:[%s76 + $0x8] sm:$0xff]
    %v261 = vld [vmem:[%s76 + $0x10] sm:$0xff]
    %v262 = vld [vmem:[%s76 + $0x18] sm:$0xff]
    %v263 = vld [vmem:[%s76 + $0x20] sm:$0xff]
    %v264 = vld [vmem:[%s76 + $0x28] sm:$0xff]
    %v265 = vld [vmem:[%s76 + $0x30] sm:$0xff]
    %v266 = vld [vmem:[%s76 + $0x38] sm:$0xff]
    %v267 = vld [vmem:[%s76 + $0x40] sm:$0xff]
    %v268 = vld [vmem:[%s76 + $0x48] sm:$0xff]
    %v269 = vld [vmem:[%s76 + $0x50] sm:$0xff]
    %v270 = vld [vmem:[%s76 + $0x58] sm:$0xff]
    %v271 = vld [vmem:[%s76 + $0x60] sm:$0xff]
    %v272 = vld [vmem:[%s76 + $0x68] sm:$0xff]
    %v273 = vld [vmem:[%s76 + $0x70] sm:$0xff]
    %v274 = vld [vmem:[%s76 + $0x78] sm:$0xff]
    %v275 = vld [vmem:[%s76 + $0x80] sm:$0xff]
    %v276 = vld [vmem:[%s76 + $0x88] sm:$0xff]
    %v277 = vld [vmem:[%s76 + $0x90] sm:$0xff]
    %v278 = vld [vmem:[%s76 + $0x98] sm:$0xff]
    %v279 = vld [vmem:[%s76 + $0xa0] sm:$0xff]
    %v280 = vld [vmem:[%s76 + $0xa8] sm:$0xff]
    %v281 = vld [vmem:[%s76 + $0xb0] sm:$0xff]
    %v282 = vld [vmem:[%s76 + $0xb8] sm:$0xff]
    %v283 = vld [vmem:[%s76 + $0xc0] sm:$0xff]
    %v284 = vsub.f32 1.0, %v210
    %v285 = vsub.f32 1.0, %v212
    %v286 = vsub.f32 1.0, %v214
    %v287 = vsub.f32 1.0, %v216
    %v288 = vsub.f32 1.0, %v218
    %v289 = vsub.f32 1.0, %v220
    %v290 = vsub.f32 1.0, %v222
    %v291 = vsub.f32 1.0, %v224
    %v292 = vsub.f32 1.0, %v226
    %v293 = vsub.f32 1.0, %v228
    %v294 = vsub.f32 1.0, %v230
    %v295 = vsub.f32 1.0, %v232
    %v296 = vsub.f32 1.0, %v234
    %v297 = vsub.f32 1.0, %v236
    %v298 = vsub.f32 1.0, %v238
    %v299 = vsub.f32 1.0, %v240
    %v300 = vsub.f32 1.0, %v242
    %v301 = vsub.f32 1.0, %v244
    %v302 = vsub.f32 1.0, %v246
    %v303 = vsub.f32 1.0, %v248
    %v304 = vsub.f32 1.0, %v250
    %v305 = vsub.f32 1.0, %v252
    %v306 = vsub.f32 1.0, %v254
    %v307 = vsub.f32 1.0, %v256
    %v308 = vsub.f32 1.0, %v258
    %v309 = vmax.f32 %v284, 0.0
    %v310 = vmax.f32 %v285, 0.0
    %v311 = vmax.f32 %v286, 0.0
    %v312 = vmax.f32 %v287, 0.0
    %v313 = vmax.f32 %v288, 0.0
    %v314 = vmax.f32 %v289, 0.0
    %v315 = vmax.f32 %v290, 0.0
    %v316 = vmax.f32 %v291, 0.0
    %v317 = vmax.f32 %v292, 0.0
    %v318 = vmax.f32 %v293, 0.0
    %v319 = vmax.f32 %v294, 0.0
    %v320 = vmax.f32 %v295, 0.0
    %v321 = vmax.f32 %v296, 0.0
    %v322 = vmax.f32 %v297, 0.0
    %v323 = vmax.f32 %v298, 0.0
    %v324 = vmax.f32 %v299, 0.0
    %v325 = vmax.f32 %v300, 0.0
    %v326 = vmax.f32 %v301, 0.0
    %v327 = vmax.f32 %v302, 0.0
    %v328 = vmax.f32 %v303, 0.0
    %v329 = vmax.f32 %v304, 0.0
    %v330 = vmax.f32 %v305, 0.0
    %v331 = vmax.f32 %v306, 0.0
    %v332 = vmax.f32 %v307, 0.0
    %v333 = vmax.f32 %v308, 0.0
    %v334 = vsub.f32 %v309, %v210
    %v335 = vsub.f32 %v310, %v212
    %v336 = vsub.f32 %v311, %v214
    %v337 = vsub.f32 %v312, %v216
    %v338 = vsub.f32 %v313, %v218
    %v339 = vsub.f32 %v314, %v220
    %v340 = vsub.f32 %v315, %v222
    %v341 = vsub.f32 %v316, %v224
    %v342 = vsub.f32 %v317, %v226
    %v343 = vsub.f32 %v318, %v228
    %v344 = vsub.f32 %v319, %v230
    %v345 = vsub.f32 %v320, %v232
    %v346 = vsub.f32 %v321, %v234
    %v347 = vsub.f32 %v322, %v236
    %v348 = vsub.f32 %v323, %v238
    %v349 = vsub.f32 %v324, %v240
    %v350 = vsub.f32 %v325, %v242
    %v351 = vsub.f32 %v326, %v244
    %v352 = vsub.f32 %v327, %v246
    %v353 = vsub.f32 %v328, %v248
    %v354 = vsub.f32 %v329, %v250
    %v355 = vsub.f32 %v330, %v252
    %v356 = vsub.f32 %v331, %v254
    %v357 = vsub.f32 %v332, %v256
    %v358 = vsub.f32 %v333, %v258
    %v359 = vmul.f32 %v259, %v334
    %v360 = vmul.f32 %v260, %v335
    %v361 = vmul.f32 %v261, %v336
    %v362 = vmul.f32 %v262, %v337
    %v363 = vmul.f32 %v263, %v338
    %v364 = vmul.f32 %v264, %v339
    %v365 = vmul.f32 %v265, %v340
    %v366 = vmul.f32 %v266, %v341
    %v367 = vmul.f32 %v267, %v342
    %v368 = vmul.f32 %v268, %v343
    %v369 = vmul.f32 %v269, %v344
    %v370 = vmul.f32 %v270, %v345
    %v371 = vmul.f32 %v271, %v346
    %v372 = vmul.f32 %v272, %v347
    %v373 = vmul.f32 %v273, %v348
    %v374 = vmul.f32 %v274, %v349
    %v375 = vmul.f32 %v275, %v350
    %v376 = vmul.f32 %v276, %v351
    %v377 = vmul.f32 %v277, %v352
    %v378 = vmul.f32 %v278, %v353
    %v379 = vmul.f32 %v279, %v354
    %v380 = vmul.f32 %v280, %v355
    %v381 = vmul.f32 %v281, %v356
    %v382 = vmul.f32 %v282, %v357
    %v383 = vmul.f32 %v283, %v358
    %v384 = vadd.f32 %v210, %v359
    %v385 = vadd.f32 %v212, %v360
    %v386 = vadd.f32 %v214, %v361
    %v387 = vadd.f32 %v216, %v362
    %v388 = vadd.f32 %v218, %v363
    %v389 = vadd.f32 %v220, %v364
    %v390 = vadd.f32 %v222, %v365
    %v391 = vadd.f32 %v224, %v366
    %v392 = vadd.f32 %v226, %v367
    %v393 = vadd.f32 %v228, %v368
    %v394 = vadd.f32 %v230, %v369
    %v395 = vadd.f32 %v232, %v370
    %v396 = vadd.f32 %v234, %v371
    %v397 = vadd.f32 %v236, %v372
    %v398 = vadd.f32 %v238, %v373
    %v399 = vadd.f32 %v240, %v374
    %v400 = vadd.f32 %v242, %v375
    %v401 = vadd.f32 %v244, %v376
    %v402 = vadd.f32 %v246, %v377
    %v403 = vadd.f32 %v248, %v378
    %v404 = vadd.f32 %v250, %v379
    %v405 = vadd.f32 %v252, %v380
    %v406 = vadd.f32 %v254, %v381
    %v407 = vadd.f32 %v256, %v382
    %v408 = vadd.f32 %v258, %v383
    %v409 = vld [vmem:[#allocation2] sm:$0xff]
    %v410 = vld [vmem:[#allocation2 + $0x8] sm:$0xff]
    %v411 = vld [vmem:[#allocation2 + $0x10] sm:$0xff]
    %v412 = vld [vmem:[#allocation2 + $0x18] sm:$0xff]
    %v413 = vld [vmem:[#allocation2 + $0x20] sm:$0xff]
    %v414 = vld [vmem:[#allocation2 + $0x28] sm:$0xff]
    %v415 = vld [vmem:[#allocation2 + $0x30] sm:$0xff]
    %v416 = vld [vmem:[#allocation2 + $0x38] sm:$0xff]
    %v417 = vld [vmem:[#allocation2 + $0x40] sm:$0xff]
    %v418 = vld [vmem:[#allocation2 + $0x48] sm:$0xff]
    %v419 = vld [vmem:[#allocation2 + $0x50] sm:$0xff]
    %v420 = vld [vmem:[#allocation2 + $0x58] sm:$0xff]
    %v421 = vld [vmem:[#allocation2 + $0x60] sm:$0xff]
    %v422 = vld [vmem:[#allocation2 + $0x68] sm:$0xff]
    %v423 = vld [vmem:[#allocation2 + $0x70] sm:$0xff]
    %v424 = vld [vmem:[#allocation2 + $0x78] sm:$0xff]
    %v425 = vld [vmem:[#allocation2 + $0x80] sm:$0xff]
    %v426 = vld [vmem:[#allocation2 + $0x88] sm:$0xff]
    %v427 = vld [vmem:[#allocation2 + $0x90] sm:$0xff]
    %v428 = vld [vmem:[#allocation2 + $0x98] sm:$0xff]
    %v429 = vld [vmem:[#allocation2 + $0xa0] sm:$0xff]
    %v430 = vld [vmem:[#allocation2 + $0xa8] sm:$0xff]
    %v431 = vld [vmem:[#allocation2 + $0xb0] sm:$0xff]
    %v432 = vld [vmem:[#allocation2 + $0xb8] sm:$0xff]
    %v433 = vld [vmem:[#allocation2 + $0xc0] sm:$0xff]
    %v434 = vadd.f32 %v409, %v384
    %v435 = vadd.f32 %v410, %v385
    %v436 = vadd.f32 %v411, %v386
    %v437 = vadd.f32 %v412, %v387
    %v438 = vadd.f32 %v413, %v388
    %v439 = vadd.f32 %v414, %v389
    %v440 = vadd.f32 %v415, %v390
    %v441 = vadd.f32 %v416, %v391
    %v442 = vadd.f32 %v417, %v392
    %v443 = vadd.f32 %v418, %v393
    %v444 = vadd.f32 %v419, %v394
    %v445 = vadd.f32 %v420, %v395
    %v446 = vadd.f32 %v421, %v396
    %v447 = vadd.f32 %v422, %v397
    %v448 = vadd.f32 %v423, %v398
    %v449 = vadd.f32 %v424, %v399
    %v450 = vadd.f32 %v425, %v400
    %v451 = vadd.f32 %v426, %v401
    %v452 = vadd.f32 %v427, %v402
    %v453 = vadd.f32 %v428, %v403
    %v454 = vadd.f32 %v429, %v404
    %v455 = vadd.f32 %v430, %v405
    %v456 = vadd.f32 %v431, %v406
    %v457 = vadd.f32 %v432, %v407
    %v458 = vadd.f32 %v433, %v408
    %vm459 = vcmask 7168
    %460 = vst.msk [vmem:[#allocation2] sm:$0xff] %vm459, %v434
    %461 = vst.msk [vmem:[#allocation2 + $0x8] sm:$0xff] %vm459, %v435
    %462 = vst.msk [vmem:[#allocation2 + $0x10] sm:$0xff] %vm459, %v436
    %463 = vst.msk [vmem:[#allocation2 + $0x18] sm:$0xff] %vm459, %v437
    %464 = vst.msk [vmem:[#allocation2 + $0x20] sm:$0xff] %vm459, %v438
    %465 = vst.msk [vmem:[#allocation2 + $0x28] sm:$0xff] %vm459, %v439
    %466 = vst.msk [vmem:[#allocation2 + $0x30] sm:$0xff] %vm459, %v440
    %467 = vst.msk [vmem:[#allocation2 + $0x38] sm:$0xff] %vm459, %v441
    %468 = vst.msk [vmem:[#allocation2 + $0x40] sm:$0xff] %vm459, %v442
    %469 = vst.msk [vmem:[#allocation2 + $0x48] sm:$0xff] %vm459, %v443
    %470 = vst.msk [vmem:[#allocation2 + $0x50] sm:$0xff] %vm459, %v444
    %471 = vst.msk [vmem:[#allocation2 + $0x58] sm:$0xff] %vm459, %v445
    %472 = vst.msk [vmem:[#allocation2 + $0x60] sm:$0xff] %vm459, %v446
    %473 = vst.msk [vmem:[#allocation2 + $0x68] sm:$0xff] %vm459, %v447
    %474 = vst.msk [vmem:[#allocation2 + $0x70] sm:$0xff] %vm459, %v448
    %475 = vst.msk [vmem:[#allocation2 + $0x78] sm:$0xff] %vm459, %v449
    %476 = vst.msk [vmem:[#allocation2 + $0x80] sm:$0xff] %vm459, %v450
    %477 = vst.msk [vmem:[#allocation2 + $0x88] sm:$0xff] %vm459, %v451
    %478 = vst.msk [vmem:[#allocation2 + $0x90] sm:$0xff] %vm459, %v452
    %479 = vst.msk [vmem:[#allocation2 + $0x98] sm:$0xff] %vm459, %v453
    %480 = vst.msk [vmem:[#allocation2 + $0xa0] sm:$0xff] %vm459, %v454
    %481 = vst.msk [vmem:[#allocation2 + $0xa8] sm:$0xff] %vm459, %v455
    %482 = vst.msk [vmem:[#allocation2 + $0xb0] sm:$0xff] %vm459, %v456
    %483 = vst.msk [vmem:[#allocation2 + $0xb8] sm:$0xff] %vm459, %v457
    %484 = vst.msk [vmem:[#allocation2 + $0xc0] sm:$0xff] %vm459, %v458
    // Predicated region
    $region22: #{tpu_custom_call.1} parent=1 // pred_check
      %p485 = pneg %p79
    $region23: #{tpu_custom_call.1} parent=1 // pred_check_branch
      %487 = sbr.rel (%p485) target = $region25
    $region24: #{tpu_custom_call.1} parent=1 // pred_region
      %v488 = vld [vmem:[#allocation2] sm:$0xff]
      %v489 = vld [vmem:[#allocation2 + $0x8] sm:$0xff]
      %v490 = vld [vmem:[#allocation2 + $0x10] sm:$0xff]
      %v491 = vld [vmem:[#allocation2 + $0x18] sm:$0xff]
      %v492 = vld [vmem:[#allocation2 + $0x20] sm:$0xff]
      %v493 = vld [vmem:[#allocation2 + $0x28] sm:$0xff]
      %v494 = vld [vmem:[#allocation2 + $0x30] sm:$0xff]
      %v495 = vld [vmem:[#allocation2 + $0x38] sm:$0xff]
      %v496 = vld [vmem:[#allocation2 + $0x40] sm:$0xff]
      %v497 = vld [vmem:[#allocation2 + $0x48] sm:$0xff]
      %v498 = vld [vmem:[#allocation2 + $0x50] sm:$0xff]
      %v499 = vld [vmem:[#allocation2 + $0x58] sm:$0xff]
      %v500 = vld [vmem:[#allocation2 + $0x60] sm:$0xff]
      %v501 = vld [vmem:[#allocation2 + $0x68] sm:$0xff]
      %v502 = vld [vmem:[#allocation2 + $0x70] sm:$0xff]
      %v503 = vld [vmem:[#allocation2 + $0x78] sm:$0xff]
      %v504 = vld [vmem:[#allocation2 + $0x80] sm:$0xff]
      %v505 = vld [vmem:[#allocation2 + $0x88] sm:$0xff]
      %v506 = vld [vmem:[#allocation2 + $0x90] sm:$0xff]
      %v507 = vld [vmem:[#allocation2 + $0x98] sm:$0xff]
      %v508 = vld [vmem:[#allocation2 + $0xa0] sm:$0xff]
      %v509 = vld [vmem:[#allocation2 + $0xa8] sm:$0xff]
      %v510 = vld [vmem:[#allocation2 + $0xb0] sm:$0xff]
      %v511 = vld [vmem:[#allocation2 + $0xb8] sm:$0xff]
      %v512 = vld [vmem:[#allocation2 + $0xc0] sm:$0xff]
      %v513 = vsel %vm459, %v488, 0.0
      %v514 = vsel %vm459, %v489, 0.0
      %v515 = vadd.f32 %v513, %v514
      %v516 = vsel %vm459, %v490, 0.0
      %v517 = vadd.f32 %v515, %v516
      %v518 = vsel %vm459, %v491, 0.0
      %v519 = vadd.f32 %v517, %v518
      %v520 = vsel %vm459, %v492, 0.0
      %v521 = vadd.f32 %v519, %v520
      %v522 = vsel %vm459, %v493, 0.0
      %v523 = vadd.f32 %v521, %v522
      %v524 = vsel %vm459, %v494, 0.0
      %v525 = vadd.f32 %v523, %v524
      %v526 = vsel %vm459, %v495, 0.0
      %v527 = vadd.f32 %v525, %v526
      %v528 = vsel %vm459, %v496, 0.0
      %v529 = vadd.f32 %v527, %v528
      %v530 = vsel %vm459, %v497, 0.0
      %v531 = vadd.f32 %v529, %v530
      %v532 = vsel %vm459, %v498, 0.0
      %v533 = vadd.f32 %v531, %v532
      %v534 = vsel %vm459, %v499, 0.0
      %v535 = vadd.f32 %v533, %v534
      %v536 = vsel %vm459, %v500, 0.0
      %v537 = vadd.f32 %v535, %v536
      %v538 = vsel %vm459, %v501, 0.0
      %v539 = vadd.f32 %v537, %v538
      %v540 = vsel %vm459, %v502, 0.0
      %v541 = vadd.f32 %v539, %v540
      %v542 = vsel %vm459, %v503, 0.0
      %v543 = vadd.f32 %v541, %v542
      %v544 = vsel %vm459, %v504, 0.0
      %v545 = vadd.f32 %v543, %v544
      %v546 = vsel %vm459, %v505, 0.0
      %v547 = vadd.f32 %v545, %v546
      %v548 = vsel %vm459, %v506, 0.0
      %v549 = vadd.f32 %v547, %v548
      %v550 = vsel %vm459, %v507, 0.0
      %v551 = vadd.f32 %v549, %v550
      %v552 = vsel %vm459, %v508, 0.0
      %v553 = vadd.f32 %v551, %v552
      %v554 = vsel %vm459, %v509, 0.0
      %v555 = vadd.f32 %v553, %v554
      %v556 = vsel %vm459, %v510, 0.0
      %v557 = vadd.f32 %v555, %v556
      %v558 = vsel %vm459, %v511, 0.0
      %v559 = vadd.f32 %v557, %v558
      %v560 = vsel %vm459, %v512, 0.0
      %v561 = vadd.f32 %v559, %v560
      %v562 = vrot.slane %v561, 4
      %v563 = vadd.f32 %v561, %v562
      %v564 = vrot.slane %v563, 2
      %v565 = vadd.f32 %v563, %v564
      %v566 = vrot.slane %v565, 1
      %v567 = vadd.f32 %v565, %v566
      %vm568 = vcmask 0
      %569 = vst.msk [vmem:[#allocation6] sm:$0x1] %vm568, %v567
    $region25: #{tpu_custom_call.1} parent=1 // pred_fallthru
      _
    // Predicated region
    $region26: #{tpu_custom_call.1} parent=1 // pred_check
      _
    $region27: #{tpu_custom_call.1} parent=1 // pred_check_branch
      %571 = sbr.rel (0) target = $region29
    $region28: #{tpu_custom_call.1} parent=1 // pred_region
      %s573 = ssub.s32 16, 16
      %574 = vsyncadd [#allocation5], %s573
      %s576 = sshll.u32 [#allocation6], 4
      %s577 = int_to_ptr.vmem [resolvable:$true] %s576
      %579 = dma.vmem_to_hbm [thread:$0]  %s577, 16, %s3, [#allocation5]
    $region29: #{tpu_custom_call.1} parent=1 // pred_fallthru
      _
    // Predicated region
    $region30: #{tpu_custom_call.1} parent=1 // pred_check
      _
    $region31: #{tpu_custom_call.1} parent=1 // pred_check_branch
      %581 = sbr.rel (0) target = $region33
    $region32: #{tpu_custom_call.1} parent=1 // pred_region
      %582 = dma.done [#allocation5], 16
    $region33: #{tpu_custom_call.1} parent=1 // pred_fallthru
      _
    %583 = vsyncpa [#allocation4], 1
    %584 = vsyncpa [#allocation5], 1

</llo_original>
